<compile_context>
chip_gen: v7x
topology: tpu7x:2x2x1
jax: 0.10.0
libtpu: 0.0.40
codegen_flags: <defaults>
</compile_context>

<pallas_src>
import jax
import jax.numpy as jnp
from jax import lax
from jax.experimental import pallas as pl
from jax.experimental.pallas import tpu as pltpu

_LANE_CHUNK = 512  # compute/register tile width (4 f32 vregs per (m, r) row)


def _integral_kernel(x_ref, o_ref):
    """x_ref: (M, R, TN) tile; o_ref: (M, TN) tile.

    out[m, n] = sum_r r * x[m, r, n], accumulated in float32.
    Full-vreg loads + one weighted cross-sublane reduce per lane chunk.
    """
    M, R, TN = x_ref.shape
    # Hoisted weight column (1, R, 1); broadcast over M and lanes in the mul.
    w = lax.broadcasted_iota(jnp.int32, (1, R, 1), 1).astype(jnp.float32)
    chunk = min(TN, _LANE_CHUNK)
    # Static lane-chunk loop: all starts/sizes are multiples of 128 (TN is a
    # multiple of 128 by construction), so every slice is a dense vld/vst.
    for start in range(0, TN, chunk):
        c = min(chunk, TN - start)
        xs = x_ref[:, :, start:start + c].astype(jnp.float32)        # (M, R, c)
        o_ref[:, start:start + c] = jnp.sum(xs * w, axis=1).astype(o_ref.dtype)


def _default_vmem_budget_bytes():
    """Budget for the double-buffered (input + output) pipeline tiles.

    Default scoped VMEM is 16 MiB on v5e and 32 MiB on v6e/v7x; leave headroom
    for Pallas internal scratch and in-kernel temporaries.
    """
    try:
        kind = jax.devices()[0].device_kind.lower()
    except Exception:
        kind = ""
    if ("v6" in kind) or ("v7" in kind):
        return 24 * 1024 * 1024
    return 10 * 1024 * 1024          # conservative: v5e and anything unknown


def _choose_tile_n(M, R, N, itemsize, *, vmem_budget_bytes=None,
                   tn_cap=8192, min_steps=4, min_step_in_bytes=1 << 20):
    """Pick the lane tile: as large as possible (amortize ~0.35 us/step grid
    overhead), capped by the double-buffered VMEM footprint, and shrunk only as
    far as ~1 MiB of input per step to keep >= min_steps grid steps."""
    if vmem_budget_bytes is None:
        vmem_budget_bytes = _default_vmem_budget_bytes()
    n_pad = pl.cdiv(N, 128) * 128
    per_lane = 2 * M * (R + 1) * itemsize          # 2 bufs x (input + output) per lane
    tn = max(128, min((vmem_budget_bytes // per_lane) // 128 * 128, tn_cap, n_pad))
    step_in = M * R * itemsize                     # input bytes per lane of tile
    min_tn = max(128, min(tn, (min_step_in_bytes // step_in) // 128 * 128))
    while pl.cdiv(n_pad, tn) < min_steps and (tn // 2) // 128 * 128 >= min_tn:
        tn = (tn // 2) // 128 * 128
    return tn                                      # always a multiple of 128


def integral_forward(x, *, tn=None):
    """x: (B, C, R, N) -> (B, C, N) with out[b,c,n] = sum_r r * x[b,c,r,n]."""
    B, C, R, N = x.shape
    M = B * C
    xm = x.reshape(M, R, N)                        # free (row-major contiguous)
    if tn is None:
        tn = _choose_tile_n(M, R, N, x.dtype.itemsize)
    grid = (pl.cdiv(N, tn),)                       # ragged last block is masked

    cost = pl.CostEstimate(
        flops=2 * M * R * N,
        transcendentals=0,
        bytes_accessed=(M * R * N + M * N) * x.dtype.itemsize,
    )

    out = pl.pallas_call(
        _integral_kernel,
        out_shape=jax.ShapeDtypeStruct((M, N), x.dtype),
        grid_spec=pl.GridSpec(
            grid=grid,
            in_specs=[pl.BlockSpec((M, R, tn), lambda n: (0, 0, n))],
            out_specs=pl.BlockSpec((M, tn), lambda n: (0, n)),
        ),
        compiler_params=pltpu.CompilerParams(
            dimension_semantics=("parallel",),
        ),
        cost_estimate=cost,
    )(xm)
    return out.reshape(B, C, N)


if __name__ == "__main__":
    # cfg.reg_max = 15  ->  R = reg_max + 1 = 16 bins
    reg_max = 15
    B, C, R = 2, 4, reg_max + 1

    key = jax.random.PRNGKey(0)
    k_a, k_b, k_c, k_d = jax.random.split(key, 4)

    def ref_fn(x):
        rng = jnp.arange(0, x.shape[2], dtype=jnp.float32).reshape(1, 1, -1, 1)
        return (x.astype(jnp.float32) * rng).sum(axis=2).astype(x.dtype)

    # 1) f32, lane-dense N (multiple of 128) -> single full-N block
    x1 = jax.random.normal(k_a, (B, C, R, 256), dtype=jnp.float32)
    o1 = jax.block_until_ready(integral_forward(x1))
    assert o1.shape == (B, C, 256), o1.shape
    assert o1.dtype == x1.dtype, o1.dtype
    assert jnp.allclose(o1, ref_fn(x1), atol=1e-4, rtol=1e-4), \
        float(jnp.max(jnp.abs(o1 - ref_fn(x1))))

    # 2) ragged N (not a multiple of 128) -> masked edge lanes, no host-side pad
    x2 = jax.random.normal(k_b, (B, C, R, 200), dtype=jnp.float32)
    o2 = jax.block_until_ready(integral_forward(x2))
    assert o2.shape == (B, C, 200), o2.shape
    assert jnp.allclose(o2, ref_fn(x2), atol=1e-4, rtol=1e-4), \
        float(jnp.max(jnp.abs(o2 - ref_fn(x2))))

    # 3) bf16 input (halves HBM traffic); kernel accumulates in f32
    x3 = jax.random.normal(k_c, (B, C, R, 256), dtype=jnp.float32).astype(jnp.bfloat16)
    o3 = jax.block_until_ready(integral_forward(x3))
    assert o3.shape == (B, C, 256) and o3.dtype == jnp.bfloat16
    assert jnp.allclose(o3.astype(jnp.float32), ref_fn(x3).astype(jnp.float32),
                        atol=0.25, rtol=0.05)

    # 4) multi-step grid + multi-chunk in-kernel loop + ragged final block
    #    (explicit tn override so a small test still exercises these paths)
    x4 = jax.random.normal(k_d, (B, C, R, 1200), dtype=jnp.float32)
    o4 = jax.block_until_ready(integral_forward(x4, tn=1024))
    assert o4.shape == (B, C, 1200), o4.shape
    assert jnp.allclose(o4, ref_fn(x4), atol=1e-4, rtol=1e-4), \
        float(jnp.max(jnp.abs(o4 - ref_fn(x4))))

    print("KERNEL_OK")
</pallas_src>

<mosaic_0001>
module attributes {stable_mosaic.version = 11 : i64} {
  func.func @_integral_kernel(%arg0: i32, %arg1: memref<8x16x256xf32, #tpu.memory_space<vmem>>, %arg2: memref<8x256xf32, #tpu.memory_space<vmem>>) attributes {dimension_semantics = [#tpu.dimension_semantics<parallel>], iteration_bounds = array<i64: 1>, scalar_prefetch = 0 : i64, scratch_operands = 0 : i64, tpu.core_type = #tpu.core_type<tc>, window_params = [{transform_indices = @transform_0, window_bounds = array<i64: 8, 16, 256>}, {transform_indices = @transform_1, window_bounds = array<i64: 8, 256>}]} {
    %0 = tpu.iota {dimensions = array<i32: 1>} : vector<1x16x1xi32>
    %1 = arith.sitofp %0 : vector<1x16x1xi32> to vector<1x16x1xf32>
    %c0 = arith.constant 0 : index
    %c0_0 = arith.constant 0 : index
    %c0_1 = arith.constant 0 : index
    %2 = vector.load %arg1[%c0, %c0_0, %c0_1] : memref<8x16x256xf32, #tpu.memory_space<vmem>>, vector<8x16x256xf32>
    %3 = vector.broadcast %1 : vector<1x16x1xf32> to vector<8x16x256xf32>
    %4 = arith.mulf %2, %3 : vector<8x16x256xf32>
    %cst = arith.constant dense<0.000000e+00> : vector<8x256xf32>
    %5 = vector.multi_reduction <add>, %4, %cst [1] : vector<8x16x256xf32> to vector<8x256xf32>
    %c0_2 = arith.constant 0 : index
    %c0_3 = arith.constant 0 : index
    %6 = vector.load %arg2[%c0_2, %c0_3] : memref<8x256xf32, #tpu.memory_space<vmem>>, vector<8x256xf32>
    tpu.vector_store %arg2[%c0_2, %c0_3], %5 {strides = array<i32>} : memref<8x256xf32, #tpu.memory_space<vmem>>, vector<8x256xf32>,
    return
  }
  func.func @transform_0(%arg0: i32) -> (i32, i32, i32) {
    %c0_i32 = arith.constant 0 : i32
    %c0_i32_0 = arith.constant 0 : i32
    %c0_i32_1 = arith.constant 0 : i32
    return %c0_i32, %c0_i32_0, %arg0 : i32, i32, i32
  }
  func.func @transform_1(%arg0: i32) -> (i32, i32) {
    %c0_i32 = arith.constant 0 : i32
    %c0_i32_0 = arith.constant 0 : i32
    return %c0_i32, %arg0 : i32, i32
  }
}

</mosaic_0001>

<llo_original>
// kernel: tpu_custom_call.1
$region0: #{tpu_custom_call.1}
  #allocation0 [shape = 'u32[]', space=smem, size = 0x4, offset = 0x4, fixed_abs, tag = 'smem constant byte address 0x4 - core index']
  #allocation1 [shape = 'u32[144,128]{1,0:T(1,128)}', space=vmem, size = 0x12000, scoped, tag = 'internal scratch']
  %s0 = inlined_call_operand.hbm [shape: f32[8,16,256], index: 0, kind: input, shape index: {}]
  %s1 = inlined_call_operand.hbm [shape: f32[8,256], index: 1, kind: output, shape index: {}]
  %s2 = sld [smem:[#allocation0]]
  $region18: #{tpu_custom_call.1} parent=0
    _
  %s4 = ssub.s32 1, %s2
  %s5 = scalar_select 0, %s4, %s2
  $region1: #{tpu_custom_call.1} parent=0
    #allocation2 [shape = 'u8[131072]{0}', space=vmem, size = 0x20000, scoped, tag = 'input window, operand 0, single buffered']
    #allocation3 [shape = 's32[1]{0}', space=sflag, size = 0x4, scoped, tag = 'scoped memory for tpu_custom_call.1']
    #allocation4 [shape = 's32[1]{0}', space=sflag, size = 0x4, scoped, tag = 'scoped memory for tpu_custom_call.1']
    #allocation5 [shape = 'u8[8192]{0}', space=vmem, size = 0x2000, scoped, tag = 'output window, operand 0, single buffered']
    %6 = vsyncpa [#allocation3], 0
    %7 = vsyncpa [#allocation4], 0
    // Predicated region
    $region2: #{tpu_custom_call.1} parent=1 // pred_check
      _
    $region3: #{tpu_custom_call.1} parent=1 // pred_check_branch
      %9 = sbr.rel (0) target = $region5
    $region4: #{tpu_custom_call.1} parent=1 // pred_region
      %s11 = ssub.s32 4096, 4096
      %12 = vsyncadd [#allocation3], %s11
      %s13 = sshll.u32 [#allocation2], 4
      %s14 = int_to_ptr.vmem [resolvable:$true] %s13
      %19 = dma.hbm_to_vmem [thread:$0]  %s0, 4096, %s14, [#allocation3], 256, 256, 16
    $region5: #{tpu_custom_call.1} parent=1 // pred_fallthru
      _
    // Predicated region
    $region6: #{tpu_custom_call.1} parent=1 // pred_check
      _
    $region7: #{tpu_custom_call.1} parent=1 // pred_check_branch
      %21 = sbr.rel (0) target = $region9
    $region8: #{tpu_custom_call.1} parent=1 // pred_region
      %22 = dma.done [#allocation3], 4096
    $region9: #{tpu_custom_call.1} parent=1 // pred_fallthru
      _
    %v23 = vlaneseq
    %v24 = vshrl.u32 %v23, 7
    %v25 = vadd.s32 %v24, 8
    %v26 = vcvt.s32.f32 %v24
    %v27 = vcvt.s32.f32 %v25
    %v28 = vld [vmem:[#allocation2] sm:$0xff]
    %v29 = vld [vmem:[#allocation2 + $0x8] sm:$0xff]
    %v30 = vld [vmem:[#allocation2 + $0x10] sm:$0xff]
    %v31 = vld [vmem:[#allocation2 + $0x18] sm:$0xff]
    %v32 = vld [vmem:[#allocation2 + $0x20] sm:$0xff]
    %v33 = vld [vmem:[#allocation2 + $0x28] sm:$0xff]
    %v34 = vld [vmem:[#allocation2 + $0x30] sm:$0xff]
    %v35 = vld [vmem:[#allocation2 + $0x38] sm:$0xff]
    %v36 = vld [vmem:[#allocation2 + $0x40] sm:$0xff]
    %v37 = vld [vmem:[#allocation2 + $0x48] sm:$0xff]
    %v38 = vld [vmem:[#allocation2 + $0x50] sm:$0xff]
    %v39 = vld [vmem:[#allocation2 + $0x58] sm:$0xff]
    %v40 = vld [vmem:[#allocation2 + $0x60] sm:$0xff]
    %v41 = vld [vmem:[#allocation2 + $0x68] sm:$0xff]
    %v42 = vld [vmem:[#allocation2 + $0x70] sm:$0xff]
    %v43 = vld [vmem:[#allocation2 + $0x78] sm:$0xff]
    %v44 = vld [vmem:[#allocation2 + $0x80] sm:$0xff]
    %v45 = vld [vmem:[#allocation2 + $0x88] sm:$0xff]
    %v46 = vld [vmem:[#allocation2 + $0x90] sm:$0xff]
    %v47 = vld [vmem:[#allocation2 + $0x98] sm:$0xff]
    %v48 = vld [vmem:[#allocation2 + $0xa0] sm:$0xff]
    %v49 = vld [vmem:[#allocation2 + $0xa8] sm:$0xff]
    %v50 = vld [vmem:[#allocation2 + $0xb0] sm:$0xff]
    %v51 = vld [vmem:[#allocation2 + $0xb8] sm:$0xff]
    %v52 = vld [vmem:[#allocation2 + $0xc0] sm:$0xff]
    %v53 = vld [vmem:[#allocation2 + $0xc8] sm:$0xff]
    %v54 = vld [vmem:[#allocation2 + $0xd0] sm:$0xff]
    %v55 = vld [vmem:[#allocation2 + $0xd8] sm:$0xff]
    %v56 = vld [vmem:[#allocation2 + $0xe0] sm:$0xff]
    %v57 = vld [vmem:[#allocation2 + $0xe8] sm:$0xff]
    %v58 = vld [vmem:[#allocation2 + $0xf0] sm:$0xff]
    %v59 = vld [vmem:[#allocation2 + $0xf8] sm:$0xff]
    %v60 = vmul.f32 %v28, %v26
    %v61 = vmul.f32 %v29, %v26
    %v62 = vmul.f32 %v30, %v27
    %v63 = vmul.f32 %v31, %v27
    %v64 = vmul.f32 %v32, %v26
    %v65 = vmul.f32 %v33, %v26
    %v66 = vmul.f32 %v34, %v27
    %v67 = vmul.f32 %v35, %v27
    %v68 = vmul.f32 %v36, %v26
    %v69 = vmul.f32 %v37, %v26
    %v70 = vmul.f32 %v38, %v27
    %v71 = vmul.f32 %v39, %v27
    %v72 = vmul.f32 %v40, %v26
    %v73 = vmul.f32 %v41, %v26
    %v74 = vmul.f32 %v42, %v27
    %v75 = vmul.f32 %v43, %v27
    %v76 = vmul.f32 %v44, %v26
    %v77 = vmul.f32 %v45, %v26
    %v78 = vmul.f32 %v46, %v27
    %v79 = vmul.f32 %v47, %v27
    %v80 = vmul.f32 %v48, %v26
    %v81 = vmul.f32 %v49, %v26
    %v82 = vmul.f32 %v50, %v27
    %v83 = vmul.f32 %v51, %v27
    %v84 = vmul.f32 %v52, %v26
    %v85 = vmul.f32 %v53, %v26
    %v86 = vmul.f32 %v54, %v27
    %v87 = vmul.f32 %v55, %v27
    %v88 = vmul.f32 %v56, %v26
    %v89 = vmul.f32 %v57, %v26
    %v90 = vmul.f32 %v58, %v27
    %v91 = vmul.f32 %v59, %v27
    %v92 = vadd.f32 %v60, %v62
    %v93 = vrot.slane %v92, 4
    %v94 = vadd.f32 %v92, %v93
    %v95 = vrot.slane %v94, 2
    %v96 = vadd.f32 %v94, %v95
    %v97 = vrot.slane %v96, 1
    %v98 = vadd.f32 %v96, %v97
    %v99 = vadd.f32 %v61, %v63
    %v100 = vrot.slane %v99, 4
    %v101 = vadd.f32 %v99, %v100
    %v102 = vrot.slane %v101, 2
    %v103 = vadd.f32 %v101, %v102
    %v104 = vrot.slane %v103, 1
    %v105 = vadd.f32 %v103, %v104
    %v106 = vadd.f32 %v64, %v66
    %v107 = vrot.slane %v106, 4
    %v108 = vadd.f32 %v106, %v107
    %v109 = vrot.slane %v108, 2
    %v110 = vadd.f32 %v108, %v109
    %v111 = vrot.slane %v110, 1
    %v112 = vadd.f32 %v110, %v111
    %v113 = vadd.f32 %v65, %v67
    %v114 = vrot.slane %v113, 4
    %v115 = vadd.f32 %v113, %v114
    %v116 = vrot.slane %v115, 2
    %v117 = vadd.f32 %v115, %v116
    %v118 = vrot.slane %v117, 1
    %v119 = vadd.f32 %v117, %v118
    %v120 = vadd.f32 %v68, %v70
    %v121 = vrot.slane %v120, 4
    %v122 = vadd.f32 %v120, %v121
    %v123 = vrot.slane %v122, 2
    %v124 = vadd.f32 %v122, %v123
    %v125 = vrot.slane %v124, 1
    %v126 = vadd.f32 %v124, %v125
    %v127 = vadd.f32 %v69, %v71
    %v128 = vrot.slane %v127, 4
    %v129 = vadd.f32 %v127, %v128
    %v130 = vrot.slane %v129, 2
    %v131 = vadd.f32 %v129, %v130
    %v132 = vrot.slane %v131, 1
    %v133 = vadd.f32 %v131, %v132
    %v134 = vadd.f32 %v72, %v74
    %v135 = vrot.slane %v134, 4
    %v136 = vadd.f32 %v134, %v135
    %v137 = vrot.slane %v136, 2
    %v138 = vadd.f32 %v136, %v137
    %v139 = vrot.slane %v138, 1
    %v140 = vadd.f32 %v138, %v139
    %v141 = vadd.f32 %v73, %v75
    %v142 = vrot.slane %v141, 4
    %v143 = vadd.f32 %v141, %v142
    %v144 = vrot.slane %v143, 2
    %v145 = vadd.f32 %v143, %v144
    %v146 = vrot.slane %v145, 1
    %v147 = vadd.f32 %v145, %v146
    %v148 = vadd.f32 %v76, %v78
    %v149 = vrot.slane %v148, 4
    %v150 = vadd.f32 %v148, %v149
    %v151 = vrot.slane %v150, 2
    %v152 = vadd.f32 %v150, %v151
    %v153 = vrot.slane %v152, 1
    %v154 = vadd.f32 %v152, %v153
    %v155 = vadd.f32 %v77, %v79
    %v156 = vrot.slane %v155, 4
    %v157 = vadd.f32 %v155, %v156
    %v158 = vrot.slane %v157, 2
    %v159 = vadd.f32 %v157, %v158
    %v160 = vrot.slane %v159, 1
    %v161 = vadd.f32 %v159, %v160
    %v162 = vadd.f32 %v80, %v82
    %v163 = vrot.slane %v162, 4
    %v164 = vadd.f32 %v162, %v163
    %v165 = vrot.slane %v164, 2
    %v166 = vadd.f32 %v164, %v165
    %v167 = vrot.slane %v166, 1
    %v168 = vadd.f32 %v166, %v167
    %v169 = vadd.f32 %v81, %v83
    %v170 = vrot.slane %v169, 4
    %v171 = vadd.f32 %v169, %v170
    %v172 = vrot.slane %v171, 2
    %v173 = vadd.f32 %v171, %v172
    %v174 = vrot.slane %v173, 1
    %v175 = vadd.f32 %v173, %v174
    %v176 = vadd.f32 %v84, %v86
    %v177 = vrot.slane %v176, 4
    %v178 = vadd.f32 %v176, %v177
    %v179 = vrot.slane %v178, 2
    %v180 = vadd.f32 %v178, %v179
    %v181 = vrot.slane %v180, 1
    %v182 = vadd.f32 %v180, %v181
    %v183 = vadd.f32 %v85, %v87
    %v184 = vrot.slane %v183, 4
    %v185 = vadd.f32 %v183, %v184
    %v186 = vrot.slane %v185, 2
    %v187 = vadd.f32 %v185, %v186
    %v188 = vrot.slane %v187, 1
    %v189 = vadd.f32 %v187, %v188
    %v190 = vadd.f32 %v88, %v90
    %v191 = vrot.slane %v190, 4
    %v192 = vadd.f32 %v190, %v191
    %v193 = vrot.slane %v192, 2
    %v194 = vadd.f32 %v192, %v193
    %v195 = vrot.slane %v194, 1
    %v196 = vadd.f32 %v194, %v195
    %v197 = vadd.f32 %v89, %v91
    %v198 = vrot.slane %v197, 4
    %v199 = vadd.f32 %v197, %v198
    %v200 = vrot.slane %v199, 2
    %v201 = vadd.f32 %v199, %v200
    %v202 = vrot.slane %v201, 1
    %v203 = vadd.f32 %v201, %v202
    %vm220 = vcmask 1041409
    %v221 = vsel %vm220, %v112, %v98
    %vm222 = vcmask 1042434
    %v223 = vsel %vm222, %v126, %v221
    %vm224 = vcmask 1043459
    %v225 = vsel %vm224, %v140, %v223
    %vm226 = vcmask 1044484
    %v227 = vsel %vm226, %v154, %v225
    %vm228 = vcmask 1045509
    %v229 = vsel %vm228, %v168, %v227
    %vm230 = vcmask 1046534
    %v231 = vsel %vm230, %v182, %v229
    %vm232 = vcmask 1047559
    %v233 = vsel %vm232, %v196, %v231
    %v234 = vsel %vm220, %v119, %v105
    %v235 = vsel %vm222, %v133, %v234
    %v236 = vsel %vm224, %v147, %v235
    %v237 = vsel %vm226, %v161, %v236
    %v238 = vsel %vm228, %v175, %v237
    %v239 = vsel %vm230, %v189, %v238
    %v240 = vsel %vm232, %v203, %v239
    %243 = vst [vmem:[#allocation5] sm:$0xff] %v233
    %244 = vst [vmem:[#allocation5 + $0x8] sm:$0xff] %v240
    // Predicated region
    $region10: #{tpu_custom_call.1} parent=1 // pred_check
      _
    $region11: #{tpu_custom_call.1} parent=1 // pred_check_branch
      %246 = sbr.rel (0) target = $region13
    $region12: #{tpu_custom_call.1} parent=1 // pred_region
      %s248 = ssub.s32 256, 256
      %249 = vsyncadd [#allocation4], %s248
      %s251 = sshll.u32 [#allocation5], 4
      %s252 = int_to_ptr.vmem [resolvable:$true] %s251
      %254 = dma.vmem_to_hbm [thread:$0]  %s252, 256, %s1, [#allocation4]
    $region13: #{tpu_custom_call.1} parent=1 // pred_fallthru
      _
    // Predicated region
    $region14: #{tpu_custom_call.1} parent=1 // pred_check
      _
    $region15: #{tpu_custom_call.1} parent=1 // pred_check_branch
      %256 = sbr.rel (0) target = $region17
    $region16: #{tpu_custom_call.1} parent=1 // pred_region
      %257 = dma.done [#allocation4], 256
    $region17: #{tpu_custom_call.1} parent=1 // pred_fallthru
      _
    %258 = vsyncpa [#allocation3], 1
    %259 = vsyncpa [#allocation4], 1

</llo_original>
